<compile_context>
chip_gen: v7x
topology: tpu7x:2x2x1
jax: 0.10.0
libtpu: 0.0.40
codegen_flags: <defaults>
</compile_context>

<pallas_src>
import jax
import jax.numpy as jnp
from jax.experimental import pallas as pl
from jax.experimental.pallas import tpu as pltpu


def timestep_embedding_kernel(x_ref, w1_ref, b1_ref, w2_ref, b2_ref, o_ref, h_ref):
    """Grid = (batch tiles, w2-column tiles); h scratch carried along axis 1."""

    @pl.when(pl.program_id(1) == 0)
    def _():
        # First (tiny, K = C) GEMM fully in f32: promote the weights instead of
        # downcasting the activations -- matches PyTorch; cost is negligible.
        h = jnp.dot(
            x_ref[...].astype(jnp.float32),
            w1_ref[...].astype(jnp.float32),
            preferred_element_type=jnp.float32,
        )
        h = h + b1_ref[...].astype(jnp.float32)
        # SiLU in f32 (v5e has no bf16 VPU/EUP); exp goes to the EUP slot and
        # hides under the matmuls.  (Padded rows of a partial boundary tile run
        # through this too -- results are dropped on write, so it is benign.)
        h = h * jax.nn.sigmoid(h)
        # Stage once per batch tile, already in the second GEMM's operand dtype
        # (bf16 weights -> bf16 operands: fast MXU path + half the scratch).
        h_ref[...] = h.astype(h_ref.dtype)

    # Dominant GEMM against the current w2 column tile; f32 accumulation.
    out = jnp.dot(h_ref[...], w2_ref[...], preferred_element_type=jnp.float32)
    out = out + b2_ref[...].astype(jnp.float32)
    o_ref[...] = out.astype(o_ref.dtype)


def _pick_batch_tile(batch, block_m):
    """Largest multiple of 8 <= block_m dividing `batch` (avoids a masked
    partial last tile); falls back to block_m if no divisor exists."""
    tm = max(8, (block_m // 8) * 8)
    if batch % tm != 0:
        for cand in range(tm, 7, -8):
            if batch % cand == 0:
                return cand
    return tm


def timestep_embedding(sample, w1, b1, w2, b2, *, block_m=None, block_n=256):
    """sample: (B, C); w1: (C, D); b1: (1, D); w2: (D, D); b2: (1, D).
    Weights may be f32 or bf16.  Returns (B, D) in sample.dtype."""
    B, C = sample.shape
    Cw, D = w1.shape
    assert Cw == C and w2.shape == (D, D)
    assert b1.shape == (1, D) and b2.shape == (1, D)

    # ---- batch tiling -------------------------------------------------------
    if block_m is None:
        # 256 fills the 256-wide MXU on v6e/v7x and halves per-step overhead.
        block_m = 256 if B >= 256 else 128
    if B <= block_m:
        tm, nb = B, 1                      # single batch tile (full-dim block)
    else:
        tm = _pick_batch_tile(B, block_m)
        nb = pl.cdiv(B, tm)

    # ---- w2 output-column tiling -------------------------------------------
    # Small-batch (one batch tile): tile w2 so its dominant HBM fetch pipelines
    # under the per-tile matmuls.  Several batch tiles: keep w2 whole and
    # weight-stationary so it is only fetched once from HBM.
    if nb == 1 and D > block_n and block_n % 128 == 0 and D % block_n == 0:
        tn = block_n
    else:
        tn = D
    nn = D // tn
    # NOTE(v7x): when nb == 1 only the w2-column ("arbitrary") axis has >1
    # step, so the second TensorCore idles; for B >= 16 pass a smaller block_m
    # to force two batch tiles if that matters for your deployment.

    # ---- block specs --------------------------------------------------------
    # Constant-index blocks are fetched once -> single buffer (halves VMEM).
    def const_spec(shape):
        return pl.BlockSpec(shape, lambda i, j: (0, 0), pipeline_mode=pl.Buffered(1))

    x_spec = const_spec((tm, C)) if nb == 1 else pl.BlockSpec((tm, C), lambda i, j: (i, 0))
    w1_spec = const_spec((C, D))
    b1_spec = const_spec((1, D))
    if nn == 1:
        w2_spec = const_spec((D, tn))
        b2_spec = const_spec((1, tn))
    else:
        w2_spec = pl.BlockSpec((D, tn), lambda i, j: (0, j))   # double-buffered
        b2_spec = pl.BlockSpec((1, tn), lambda i, j: (0, j))
    out_spec = pl.BlockSpec((tm, tn), lambda i, j: (i, j))

    # ---- VMEM budget: leave headroom under the physical capacity ------------
    # (~48 MiB on v7x's 64 MiB/TC, ~96 MiB on v5e/v6e's 128 MiB).
    try:
        vmem_cap = pltpu.get_tpu_info().vmem_capacity_bytes
    except Exception:
        vmem_cap = 64 * 1024 * 1024        # conservative fallback (v7x-sized)
    vmem_limit = min(int(vmem_cap * 3 // 4), 100 * 1024 * 1024)

    return pl.pallas_call(
        timestep_embedding_kernel,
        out_shape=jax.ShapeDtypeStruct((B, D), sample.dtype),
        grid_spec=pltpu.PrefetchScalarGridSpec(
            num_scalar_prefetch=0,
            grid=(nb, nn),
            in_specs=[x_spec, w1_spec, b1_spec, w2_spec, b2_spec],
            out_specs=out_spec,
            # SiLU(x@w1+b1) staged per batch tile, in the second GEMM's dtype.
            scratch_shapes=[pltpu.VMEM((tm, D), w2.dtype)],
        ),
        compiler_params=pltpu.CompilerParams(
            dimension_semantics=("parallel", "arbitrary"),
            vmem_limit_bytes=vmem_limit,
        ),
    )(sample, w1, b1, w2, b2)


def _reference(sample, w1, b1, w2, b2):
    f32 = jnp.float32
    h = sample.astype(f32) @ w1.astype(f32) + b1.astype(f32)
    h = h * jax.nn.sigmoid(h)
    return h @ w2.astype(f32) + b2.astype(f32)


def _make_params(key, C, D, dtype):
    k1, k2, k3, k4 = jax.random.split(key, 4)
    w1 = (jax.random.uniform(k1, (C, D), jnp.float32, -1.0, 1.0) / jnp.sqrt(C)).astype(dtype)
    b1 = (jax.random.uniform(k2, (1, D), jnp.float32, -1.0, 1.0) / jnp.sqrt(C)).astype(dtype)
    w2 = (jax.random.uniform(k3, (D, D), jnp.float32, -1.0, 1.0) / jnp.sqrt(D)).astype(dtype)
    b2 = (jax.random.uniform(k4, (1, D), jnp.float32, -1.0, 1.0) / jnp.sqrt(D)).astype(dtype)
    return w1, b1, w2, b2


if __name__ == "__main__":
    key = jax.random.PRNGKey(0)
    kx1, kp1, kx2, kp2, kx3, kp3 = jax.random.split(key, 6)

    # --- Test 1: tiny f32 config (batch=2, channel=4, dim=128), tight tol. ---
    B, C, D = 2, 4, 128
    sample = jax.random.normal(kx1, (B, C), dtype=jnp.float32)
    w1, b1, w2, b2 = _make_params(kp1, C, D, jnp.float32)
    out = jax.block_until_ready(timestep_embedding(sample, w1, b1, w2, b2))
    ref = _reference(sample, w1, b1, w2, b2)
    assert out.shape == (B, D)
    assert jnp.allclose(out, ref, atol=1e-5, rtol=1e-5), "f32 tiny-shape mismatch"

    # --- Test 2: small-batch / column-tiled w2 path with bf16 weights
    #     (grid = (1, 2); SiLU + first GEMM in f32, second GEMM bf16 operands). ---
    B2, C2, D2 = 16, 32, 512
    sample2 = jax.random.normal(kx2, (B2, C2), dtype=jnp.float32)
    w1b, b1b, w2b, b2b = _make_params(kp2, C2, D2, jnp.bfloat16)
    out2 = jax.block_until_ready(
        timestep_embedding(sample2, w1b, b1b, w2b, b2b, block_n=256))
    ref2 = _reference(sample2, w1b, b1b, w2b, b2b)
    assert out2.shape == (B2, D2)
    assert jnp.allclose(out2, ref2, atol=5e-2, rtol=5e-2), "bf16 column-tiled mismatch"

    # --- Test 3: multi-batch-tile weight-stationary path, f32 (grid = (2, 1)). ---
    B3, C3, D3 = 384, 32, 256
    sample3 = jax.random.normal(kx3, (B3, C3), dtype=jnp.float32)
    w1c, b1c, w2c, b2c = _make_params(kp3, C3, D3, jnp.float32)
    out3 = jax.block_until_ready(timestep_embedding(sample3, w1c, b1c, w2c, b2c))
    ref3 = _reference(sample3, w1c, b1c, w2c, b2c)
    assert out3.shape == (B3, D3)
    assert jnp.allclose(out3, ref3, atol=1e-4, rtol=1e-4), "f32 batch-tiled mismatch"

    print("KERNEL_OK")
</pallas_src>

<mosaic_0001>
module attributes {stable_mosaic.version = 11 : i64} {
  func.func @timestep_embedding_kernel(%arg0: i32, %arg1: i32, %arg2: memref<2x4xf32, #tpu.memory_space<vmem>>, %arg3: memref<4x128xf32, #tpu.memory_space<vmem>>, %arg4: memref<1x128xf32, #tpu.memory_space<vmem>>, %arg5: memref<128x128xf32, #tpu.memory_space<vmem>>, %arg6: memref<1x128xf32, #tpu.memory_space<vmem>>, %arg7: memref<2x128xf32, #tpu.memory_space<vmem>>, %arg8: memref<2x128xf32, #tpu.memory_space<vmem>>) attributes {dimension_semantics = [#tpu.dimension_semantics<parallel>, #tpu.dimension_semantics<arbitrary>], iteration_bounds = array<i64: 1, 1>, scalar_prefetch = 0 : i64, scratch_operands = 1 : i64, tpu.core_type = #tpu.core_type<tc>, window_params = [{pipeline_mode = #tpu.pipeline_mode<synchronous>, transform_indices = @transform_0, window_bounds = array<i64: 2, 4>}, {pipeline_mode = #tpu.pipeline_mode<synchronous>, transform_indices = @transform_1, window_bounds = array<i64: 4, 128>}, {pipeline_mode = #tpu.pipeline_mode<synchronous>, transform_indices = @transform_2, window_bounds = array<i64: 1, 128>}, {pipeline_mode = #tpu.pipeline_mode<synchronous>, transform_indices = @transform_3, window_bounds = array<i64: 128, 128>}, {pipeline_mode = #tpu.pipeline_mode<synchronous>, transform_indices = @transform_4, window_bounds = array<i64: 1, 128>}, {transform_indices = @transform_5, window_bounds = array<i64: 2, 128>}]} {
    %c0_i32 = arith.constant 0 : i32
    %0 = arith.cmpi eq, %arg1, %c0_i32 : i32
    %1 = arith.extui %0 : i1 to i32
    %c0_i32_0 = arith.constant 0 : i32
    %2 = arith.cmpi ne, %1, %c0_i32_0 : i32
    scf.if %2 {
      %c0_8 = arith.constant 0 : index
      %c0_9 = arith.constant 0 : index
      %10 = vector.load %arg2[%c0_8, %c0_9] : memref<2x4xf32, #tpu.memory_space<vmem>>, vector<2x4xf32>
      %c0_10 = arith.constant 0 : index
      %c0_11 = arith.constant 0 : index
      %11 = vector.load %arg3[%c0_10, %c0_11] : memref<4x128xf32, #tpu.memory_space<vmem>>, vector<4x128xf32>
      %cst_12 = arith.constant dense<0.000000e+00> : vector<2x128xf32>
      %12 = tpu.matmul %10, %11, %cst_12 {dimension_numbers = #tpu.dot_dimension_numbers<[1], [0], [0], [1], [0, 0, 1, 1], [], []>} : vector<2x4xf32>, vector<4x128xf32>, vector<2x128xf32> -> vector<2x128xf32>
      %c0_13 = arith.constant 0 : index
      %c0_14 = arith.constant 0 : index
      %13 = vector.load %arg4[%c0_13, %c0_14] : memref<1x128xf32, #tpu.memory_space<vmem>>, vector<1x128xf32>
      %14 = vector.broadcast %13 : vector<1x128xf32> to vector<2x128xf32>
      %15 = arith.addf %12, %14 : vector<2x128xf32>
      %16 = arith.negf %15 : vector<2x128xf32>
      %17 = math.exp %16 : vector<2x128xf32>
      %cst_15 = arith.constant 1.000000e+00 : f32
      %18 = vector.broadcast %cst_15 : f32 to vector<2x128xf32>
      %19 = arith.addf %18, %17 : vector<2x128xf32>
      %20 = arith.divf %18, %19 : vector<2x128xf32>
      %21 = arith.mulf %15, %20 : vector<2x128xf32>
      %c0_16 = arith.constant 0 : index
      %c0_17 = arith.constant 0 : index
      %22 = vector.load %arg8[%c0_16, %c0_17] : memref<2x128xf32, #tpu.memory_space<vmem>>, vector<2x128xf32>
      tpu.vector_store %arg8[%c0_16, %c0_17], %21 {strides = array<i32>} : memref<2x128xf32, #tpu.memory_space<vmem>>, vector<2x128xf32>,
    } else {
    }
    %c0 = arith.constant 0 : index
    %c0_1 = arith.constant 0 : index
    %3 = vector.load %arg8[%c0, %c0_1] : memref<2x128xf32, #tpu.memory_space<vmem>>, vector<2x128xf32>
    %c0_2 = arith.constant 0 : index
    %c0_3 = arith.constant 0 : index
    %4 = vector.load %arg5[%c0_2, %c0_3] : memref<128x128xf32, #tpu.memory_space<vmem>>, vector<128x128xf32>
    %cst = arith.constant dense<0.000000e+00> : vector<2x128xf32>
    %5 = tpu.matmul %3, %4, %cst {dimension_numbers = #tpu.dot_dimension_numbers<[1], [0], [0], [1], [0, 0, 1, 1], [], []>} : vector<2x128xf32>, vector<128x128xf32>, vector<2x128xf32> -> vector<2x128xf32>
    %c0_4 = arith.constant 0 : index
    %c0_5 = arith.constant 0 : index
    %6 = vector.load %arg6[%c0_4, %c0_5] : memref<1x128xf32, #tpu.memory_space<vmem>>, vector<1x128xf32>
    %7 = vector.broadcast %6 : vector<1x128xf32> to vector<2x128xf32>
    %8 = arith.addf %5, %7 : vector<2x128xf32>
    %c0_6 = arith.constant 0 : index
    %c0_7 = arith.constant 0 : index
    %9 = vector.load %arg7[%c0_6, %c0_7] : memref<2x128xf32, #tpu.memory_space<vmem>>, vector<2x128xf32>
    tpu.vector_store %arg7[%c0_6, %c0_7], %8 {strides = array<i32>} : memref<2x128xf32, #tpu.memory_space<vmem>>, vector<2x128xf32>,
    return
  }
  func.func @transform_0(%arg0: i32, %arg1: i32) -> (i32, i32) {
    %c0_i32 = arith.constant 0 : i32
    %c0_i32_0 = arith.constant 0 : i32
    %c0_i32_1 = arith.constant 0 : i32
    return %c0_i32, %c0_i32_0 : i32, i32
  }
  func.func @transform_1(%arg0: i32, %arg1: i32) -> (i32, i32) {
    %c0_i32 = arith.constant 0 : i32
    %c0_i32_0 = arith.constant 0 : i32
    %c0_i32_1 = arith.constant 0 : i32
    return %c0_i32, %c0_i32_0 : i32, i32
  }
  func.func @transform_2(%arg0: i32, %arg1: i32) -> (i32, i32) {
    %c0_i32 = arith.constant 0 : i32
    %c0_i32_0 = arith.constant 0 : i32
    %c0_i32_1 = arith.constant 0 : i32
    return %c0_i32, %c0_i32_0 : i32, i32
  }
  func.func @transform_3(%arg0: i32, %arg1: i32) -> (i32, i32) {
    %c0_i32 = arith.constant 0 : i32
    %c0_i32_0 = arith.constant 0 : i32
    %c0_i32_1 = arith.constant 0 : i32
    return %c0_i32, %c0_i32_0 : i32, i32
  }
  func.func @transform_4(%arg0: i32, %arg1: i32) -> (i32, i32) {
    %c0_i32 = arith.constant 0 : i32
    %c0_i32_0 = arith.constant 0 : i32
    %c0_i32_1 = arith.constant 0 : i32
    return %c0_i32, %c0_i32_0 : i32, i32
  }
  func.func @transform_5(%arg0: i32, %arg1: i32) -> (i32, i32) {
    %c0_i32 = arith.constant 0 : i32
    return %arg0, %arg1 : i32, i32
  }
}

</mosaic_0001>

<llo_original>
// kernel: tpu_custom_call.1
$region0: #{tpu_custom_call.1}
  #allocation0 [shape = 'u32[]', space=smem, size = 0x4, offset = 0x4, fixed_abs, tag = 'smem constant byte address 0x4 - core index']
  #allocation1 [shape = 'u32[144,128]{1,0:T(1,128)}', space=vmem, size = 0x12000, scoped, tag = 'internal scratch']
  #allocation2 [shape = 'f32[2,128]{1,0:T(2,128)}', space=vmem, size = 0x400, scoped, tag = 'scratch operand']
  %s0 = inlined_call_operand.hbm [shape: f32[2,4], index: 0, kind: input, shape index: {}]
  %s1 = inlined_call_operand.hbm [shape: f32[4,128], index: 1, kind: input, shape index: {}]
  %s2 = inlined_call_operand.vmem [shape: f32[1,128], index: 2, kind: input, shape index: {}]
  %s3 = inlined_call_operand.hbm [shape: f32[128,128], index: 3, kind: input, shape index: {}]
  %s4 = inlined_call_operand.vmem [shape: f32[1,128], index: 4, kind: input, shape index: {}]
  %s5 = inlined_call_operand.hbm [shape: f32[2,128], index: 5, kind: output, shape index: {}]
  %s6 = sld [smem:[#allocation0]]
  $region46: #{tpu_custom_call.1} parent=0
    _
  %s8 = ssub.s32 1, %s6
  %s9 = scalar_select 0, %s8, %s6
  $region1: #{tpu_custom_call.1} parent=0
    #allocation3 [shape = 'u8[1024]{0}', space=vmem, size = 0x400, scoped, tag = 'input window, operand 0, single buffered']
    #allocation4 [shape = 's32[1]{0}', space=sflag, size = 0x4, scoped, tag = 'scoped memory for tpu_custom_call.1']
    #allocation5 [shape = 's32[1]{0}', space=sflag, size = 0x4, scoped, tag = 'scoped memory for tpu_custom_call.1']
    #allocation6 [shape = 'u8[2048]{0}', space=vmem, size = 0x800, scoped, tag = 'input window, operand 1, single buffered']
    #allocation7 [shape = 's32[1]{0}', space=sflag, size = 0x4, scoped, tag = 'scoped memory for tpu_custom_call.1']
    #allocation8 [shape = 'u8[65536]{0}', space=vmem, size = 0x10000, scoped, tag = 'input window, operand 3, single buffered']
    #allocation9 [shape = 'u8[1024]{0}', space=vmem, size = 0x400, scoped, tag = 'output window, operand 0, single buffered']
    %10 = vsyncpa [#allocation4], 0
    %11 = vsyncpa [#allocation7], 0
    %12 = vsyncpa [#allocation5], 0
    // Predicated region
    $region2: #{tpu_custom_call.1} parent=1 // pred_check
      _
    $region3: #{tpu_custom_call.1} parent=1 // pred_check_branch
      %14 = sbr.rel (0) target = $region5
    $region4: #{tpu_custom_call.1} parent=1 // pred_region
      %s16 = ssub.s32 32, 32
      %17 = vsyncadd [#allocation4], %s16
      %s19 = sshll.u32 [#allocation3], 4
      %s20 = int_to_ptr.vmem [resolvable:$true] %s19
      %22 = dma.hbm_to_vmem [thread:$0]  %s0, 32, %s20, [#allocation4]
    $region5: #{tpu_custom_call.1} parent=1 // pred_fallthru
      _
    // Predicated region
    $region6: #{tpu_custom_call.1} parent=1 // pred_check
      _
    $region7: #{tpu_custom_call.1} parent=1 // pred_check_branch
      %24 = sbr.rel (0) target = $region9
    $region8: #{tpu_custom_call.1} parent=1 // pred_region
      %s26 = ssub.s32 64, 64
      %27 = vsyncadd [#allocation7], %s26
      %s29 = sshll.u32 [#allocation6], 4
      %s30 = int_to_ptr.vmem [resolvable:$true] %s29
      %32 = dma.hbm_to_vmem [thread:$0]  %s1, 64, %s30, [#allocation7]
    $region9: #{tpu_custom_call.1} parent=1 // pred_fallthru
      _
    // Predicated region
    $region10: #{tpu_custom_call.1} parent=1 // pred_check
      _
    $region11: #{tpu_custom_call.1} parent=1 // pred_check_branch
      %34 = sbr.rel (0) target = $region13
    $region12: #{tpu_custom_call.1} parent=1 // pred_region
      _
    $region13: #{tpu_custom_call.1} parent=1 // pred_fallthru
      _
    // Predicated region
    $region14: #{tpu_custom_call.1} parent=1 // pred_check
      _
    $region15: #{tpu_custom_call.1} parent=1 // pred_check_branch
      %36 = sbr.rel (0) target = $region17
    $region16: #{tpu_custom_call.1} parent=1 // pred_region
      %s38 = ssub.s32 2048, 2048
      %39 = vsyncadd [#allocation7], %s38
      %s40 = sshll.u32 [#allocation8], 4
      %s41 = int_to_ptr.vmem [resolvable:$true] %s40
      %46 = dma.hbm_to_vmem [thread:$0]  %s3, 2048, %s41, [#allocation7], 128, 128, 8
    $region17: #{tpu_custom_call.1} parent=1 // pred_fallthru
      _
    // Predicated region
    $region18: #{tpu_custom_call.1} parent=1 // pred_check
      _
    $region19: #{tpu_custom_call.1} parent=1 // pred_check_branch
      %48 = sbr.rel (0) target = $region21
    $region20: #{tpu_custom_call.1} parent=1 // pred_region
      _
    $region21: #{tpu_custom_call.1} parent=1 // pred_fallthru
      _
    // Predicated region
    $region22: #{tpu_custom_call.1} parent=1 // pred_check
      _
    $region23: #{tpu_custom_call.1} parent=1 // pred_check_branch
      %50 = sbr.rel (0) target = $region25
    $region24: #{tpu_custom_call.1} parent=1 // pred_region
      %51 = dma.done [#allocation4], 32
    $region25: #{tpu_custom_call.1} parent=1 // pred_fallthru
      _
    // Predicated region
    $region26: #{tpu_custom_call.1} parent=1 // pred_check
      _
    $region27: #{tpu_custom_call.1} parent=1 // pred_check_branch
      %53 = sbr.rel (0) target = $region29
    $region28: #{tpu_custom_call.1} parent=1 // pred_region
      %54 = dma.done [#allocation7], 64
    $region29: #{tpu_custom_call.1} parent=1 // pred_fallthru
      _
    // Predicated region
    $region30: #{tpu_custom_call.1} parent=1 // pred_check
      _
    $region31: #{tpu_custom_call.1} parent=1 // pred_check_branch
      %56 = sbr.rel (0) target = $region33
    $region32: #{tpu_custom_call.1} parent=1 // pred_region
      %57 = dma.done [#allocation7], 2048
    $region33: #{tpu_custom_call.1} parent=1 // pred_fallthru
      _
    %p58 = scmp.eq.s32.totalorder 0, 0
    // Predicated region
    $region34: #{tpu_custom_call.1} parent=1 // pred_check
      %p59 = pneg %p58
    $region35: #{tpu_custom_call.1} parent=1 // pred_check_branch
      %61 = sbr.rel (%p59) target = $region37
    $region36: #{tpu_custom_call.1} parent=1 // pred_region
      %v62 = vld [vmem:[#allocation3] sm:$0x3]
      %v63 = vld [vmem:[#allocation6] sm:$0xf]
      %v64 = vld [vmem:[%s2] sm:$0x1]
      %v66 = vlaneseq
      %v67 = vshrl.u32 %v66, 7
      %v68 = vsub.s32 0, %v67
      %v69 = vrot.slane %v64, %v68
      %vm71 = vcmask 31744
      %v73 = vsel %vm71, %v62, 0
      %vm75 = vcmask 1043456
      %v77 = vsel %vm75, %v63, 0
      %79 = vmatprep.subr.mxu0 0.0
      %80 = vmatpush1.msra.mxu0 %v77
      %81 = vmatprep.subr.mxu0 0.0
      %82 = vmatpush1.msra.mxu0 0.0
      %83 = vmatprep.subr.mxu0 0.0
      %84 = vmatpush1.msra.mxu0 0.0
      %85 = vmatprep.subr.mxu0 0.0
      %86 = vmatpush1.msra.mxu0 0.0
      %87 = vmatprep.subr.mxu0 0.0
      %88 = vmatpush1.msra.mxu0 0.0
      %89 = vmatprep.subr.mxu0 0.0
      %90 = vmatpush1.msra.mxu0 0.0
      %91 = vmatprep.subr.mxu0 0.0
      %92 = vmatpush1.msra.mxu0 0.0
      %93 = vmatprep.subr.mxu0 0.0
      %94 = vmatpush1.msra.mxu0 0.0
      %95 = vmatprep.subr.mxu0 0.0
      %96 = vmatpush1.msra.mxu0 0.0
      %97 = vmatprep.subr.mxu0 0.0
      %98 = vmatpush1.msra.mxu0 0.0
      %99 = vmatprep.subr.mxu0 0.0
      %100 = vmatpush1.msra.mxu0 0.0
      %101 = vmatprep.subr.mxu0 0.0
      %102 = vmatpush1.msra.mxu0 0.0
      %103 = vmatprep.subr.mxu0 0.0
      %104 = vmatpush1.msra.mxu0 0.0
      %105 = vmatprep.subr.mxu0 0.0
      %106 = vmatpush1.msra.mxu0 0.0
      %107 = vmatprep.subr.mxu0 0.0
      %108 = vmatpush1.msra.mxu0 0.0
      %109 = vmatprep.subr.mxu0 0.0
      %110 = vmatpush1.msra.mxu0 0.0
      %111 = vmatprep.subr.mxu0 0.0
      %112 = vmatpush1.msra.mxu0 0.0
      %113 = vmatprep.subr.mxu0 0.0
      %114 = vmatpush1.msra.mxu0 0.0
      %115 = vmatprep.subr.mxu0 0.0
      %116 = vmatpush1.msra.mxu0 0.0
      %117 = vmatprep.subr.mxu0 0.0
      %118 = vmatpush1.msra.mxu0 0.0
      %119 = vmatprep.subr.mxu0 0.0
      %120 = vmatpush1.msra.mxu0 0.0
      %121 = vmatprep.subr.mxu0 0.0
      %122 = vmatpush1.msra.mxu0 0.0
      %123 = vmatprep.subr.mxu0 0.0
      %124 = vmatpush1.msra.mxu0 0.0
      %125 = vmatprep.subr.mxu0 0.0
      %126 = vmatpush1.msra.mxu0 0.0
      %127 = vmatprep.subr.mxu0 0.0
      %128 = vmatpush1.msra.mxu0 0.0
      %129 = vmatprep.subr.mxu0 0.0
      %130 = vmatpush1.msra.mxu0 0.0
      %131 = vmatprep.subr.mxu0 0.0
      %132 = vmatpush1.msra.mxu0 0.0
      %133 = vmatprep.subr.mxu0 0.0
      %134 = vmatpush1.msra.mxu0 0.0
      %135 = vmatprep.subr.mxu0 0.0
      %136 = vmatpush1.msra.mxu0 0.0
      %137 = vmatprep.subr.mxu0 0.0
      %138 = vmatpush1.msra.mxu0 0.0
      %139 = vmatprep.subr.mxu0 0.0
      %140 = vmatpush1.msra.mxu0 0.0
      %141 = vmatprep.subr.mxu0 0.0
      %142 = vmatpush1.msra.mxu0 0.0
      %143 = vmatprep.mubr.f32.mxu0 0.0
      %144 = vmatmul.mubr.f32.gmra.mrb[0].mxu0 %v73
      %v145 = vpop.f32.mrb[0].mxu0
      %v146 = vadd.f32 %v69, %v145
      %v147 = vpop.f32.mrb[0].mxu0
      %148 = vdwg.mxu0
      %v149 = vxor.u32 %v146, 2147483648
      %v150 = vmul.f32 %v149, 1.442695
      %v151 = vpow.pop %v150
      %v152 = vadd.f32 %v151, 1.0
      %v153 = vrcp.pop %v152
      %v154 = vmul.f32 1.0, %v153
      %v155 = vmul.f32 %v146, %v154
      %156 = vst [vmem:[#allocation2] sm:$0x3] %v155
    $region37: #{tpu_custom_call.1} parent=1 // pred_fallthru
      _
    %v157 = vld [vmem:[#allocation2] sm:$0x3]
    %v158 = vld [vmem:[#allocation8] sm:$0xff]
    %v159 = vld [vmem:[#allocation8 + $0x8] sm:$0xff]
    %v160 = vld [vmem:[#allocation8 + $0x10] sm:$0xff]
    %v161 = vld [vmem:[#allocation8 + $0x18] sm:$0xff]
    %v162 = vld [vmem:[#allocation8 + $0x20] sm:$0xff]
    %v163 = vld [vmem:[#allocation8 + $0x28] sm:$0xff]
    %v164 = vld [vmem:[#allocation8 + $0x30] sm:$0xff]
    %v165 = vld [vmem:[#allocation8 + $0x38] sm:$0xff]
    %v166 = vld [vmem:[#allocation8 + $0x40] sm:$0xff]
    %v167 = vld [vmem:[#allocation8 + $0x48] sm:$0xff]
    %v168 = vld [vmem:[#allocation8 + $0x50] sm:$0xff]
    %v169 = vld [vmem:[#allocation8 + $0x58] sm:$0xff]
    %v170 = vld [vmem:[#allocation8 + $0x60] sm:$0xff]
    %v171 = vld [vmem:[#allocation8 + $0x68] sm:$0xff]
    %v172 = vld [vmem:[#allocation8 + $0x70] sm:$0xff]
    %v173 = vld [vmem:[#allocation8 + $0x78] sm:$0xff]
    %v174 = vld [vmem:[%s4] sm:$0x1]
    %v176 = vlaneseq
    %v177 = vshrl.u32 %v176, 7
    %v178 = vsub.s32 0, %v177
    %v179 = vrot.slane %v174, %v178
    %181 = vmatprep.subr.mxu0 0.0
    %182 = vmatpush1.msra.mxu0 %v158
    %183 = vmatprep.subr.mxu0 0.0
    %184 = vmatpush1.msra.mxu0 %v159
    %185 = vmatprep.subr.mxu0 0.0
    %186 = vmatpush1.msra.mxu0 %v160
    %187 = vmatprep.subr.mxu0 0.0
    %188 = vmatpush1.msra.mxu0 %v161
    %189 = vmatprep.subr.mxu0 0.0
    %190 = vmatpush1.msra.mxu0 %v162
    %191 = vmatprep.subr.mxu0 0.0
    %192 = vmatpush1.msra.mxu0 %v163
    %193 = vmatprep.subr.mxu0 0.0
    %194 = vmatpush1.msra.mxu0 %v164
    %195 = vmatprep.subr.mxu0 0.0
    %196 = vmatpush1.msra.mxu0 %v165
    %197 = vmatprep.subr.mxu0 0.0
    %198 = vmatpush1.msra.mxu0 %v166
    %199 = vmatprep.subr.mxu0 0.0
    %200 = vmatpush1.msra.mxu0 %v167
    %201 = vmatprep.subr.mxu0 0.0
    %202 = vmatpush1.msra.mxu0 %v168
    %203 = vmatprep.subr.mxu0 0.0
    %204 = vmatpush1.msra.mxu0 %v169
    %205 = vmatprep.subr.mxu0 0.0
    %206 = vmatpush1.msra.mxu0 %v170
    %207 = vmatprep.subr.mxu0 0.0
    %208 = vmatpush1.msra.mxu0 %v171
    %209 = vmatprep.subr.mxu0 0.0
    %210 = vmatpush1.msra.mxu0 %v172
    %211 = vmatprep.subr.mxu0 0.0
    %212 = vmatpush1.msra.mxu0 %v173
    %213 = vmatprep.subr.mxu0 0.0
    %214 = vmatpush1.msra.mxu0 0.0
    %215 = vmatprep.subr.mxu0 0.0
    %216 = vmatpush1.msra.mxu0 0.0
    %217 = vmatprep.subr.mxu0 0.0
    %218 = vmatpush1.msra.mxu0 0.0
    %219 = vmatprep.subr.mxu0 0.0
    %220 = vmatpush1.msra.mxu0 0.0
    %221 = vmatprep.subr.mxu0 0.0
    %222 = vmatpush1.msra.mxu0 0.0
    %223 = vmatprep.subr.mxu0 0.0
    %224 = vmatpush1.msra.mxu0 0.0
    %225 = vmatprep.subr.mxu0 0.0
    %226 = vmatpush1.msra.mxu0 0.0
    %227 = vmatprep.subr.mxu0 0.0
    %228 = vmatpush1.msra.mxu0 0.0
    %229 = vmatprep.subr.mxu0 0.0
    %230 = vmatpush1.msra.mxu0 0.0
    %231 = vmatprep.subr.mxu0 0.0
    %232 = vmatpush1.msra.mxu0 0.0
    %233 = vmatprep.subr.mxu0 0.0
    %234 = vmatpush1.msra.mxu0 0.0
    %235 = vmatprep.subr.mxu0 0.0
    %236 = vmatpush1.msra.mxu0 0.0
    %237 = vmatprep.subr.mxu0 0.0
    %238 = vmatpush1.msra.mxu0 0.0
    %239 = vmatprep.subr.mxu0 0.0
    %240 = vmatpush1.msra.mxu0 0.0
    %241 = vmatprep.subr.mxu0 0.0
    %242 = vmatpush1.msra.mxu0 0.0
    %243 = vmatprep.subr.mxu0 0.0
    %244 = vmatpush1.msra.mxu0 0.0
    %245 = vmatprep.mubr.f32.mxu0 0.0
    %246 = vmatmul.mubr.f32.gmra.mrb[0].mxu0 %v157
    %v247 = vpop.f32.mrb[0].mxu0
    %v248 = vadd.f32 %v179, %v247
    %v249 = vpop.f32.mrb[0].mxu0
    %250 = vdwg.mxu0
    %251 = vst [vmem:[#allocation9] sm:$0x3] %v248
    // Predicated region
    $region38: #{tpu_custom_call.1} parent=1 // pred_check
      _
    $region39: #{tpu_custom_call.1} parent=1 // pred_check_branch
      %253 = sbr.rel (0) target = $region41
    $region40: #{tpu_custom_call.1} parent=1 // pred_region
      %s255 = ssub.s32 32, 32
      %256 = vsyncadd [#allocation5], %s255
      %s258 = sshll.u32 [#allocation9], 4
      %s259 = int_to_ptr.vmem [resolvable:$true] %s258
      %261 = dma.vmem_to_hbm [thread:$0]  %s259, 32, %s5, [#allocation5]
    $region41: #{tpu_custom_call.1} parent=1 // pred_fallthru
      _
    // Predicated region
    $region42: #{tpu_custom_call.1} parent=1 // pred_check
      _
    $region43: #{tpu_custom_call.1} parent=1 // pred_check_branch
      %263 = sbr.rel (0) target = $region45
    $region44: #{tpu_custom_call.1} parent=1 // pred_region
      %264 = dma.done [#allocation5], 32
    $region45: #{tpu_custom_call.1} parent=1 // pred_fallthru
      _
    %265 = vsyncpa [#allocation4], 1
    %266 = vsyncpa [#allocation7], 1
    %267 = vsyncpa [#allocation5], 1

</llo_original>
